<compile_context>
chip_gen: v7x
topology: tpu7x:2x2x1
jax: 0.10.0
libtpu: 0.0.40
codegen_flags: <defaults>
</compile_context>

<pallas_src>
import functools

import jax
import jax.numpy as jnp
from jax.experimental import pallas as pl
from jax.experimental.pallas import tpu as pltpu


def _round_up(x, m):
    return (x + m - 1) // m * m


def cube_addr_kernel(dirs_ref, idx_ref, fuv_ref, *, res):
    """Per-pixel cube-face selection + bilinear footprint.

    dirs_ref: [3, R, 128] world directions (pixels dense on sublanes x lanes).
    idx_ref : [4, R, 128] int32 flat indices into base.reshape(6*res*res, 3).
    fuv_ref : [2, R, 128] f32 fractional (fu, fv) of the bilinear footprint.
    """
    # to_opengl = [[1,0,0],[0,0,1],[0,-1,0]];  l @ to_opengl.T == (x, y, z) -> (x, z, -y).
    # Folded in as a free row remap instead of a matmul.
    x = dirs_ref[0, :, :]
    y = dirs_ref[2, :, :]
    z = -dirs_ref[1, :, :]

    ax, ay, az = jnp.abs(x), jnp.abs(y), jnp.abs(z)
    use_z = az > jnp.maximum(ax, ay)
    use_y = jnp.logical_and(jnp.logical_not(use_z), ay > ax)
    use_x = jnp.logical_not(jnp.logical_or(use_z, use_y))

    # nvdiffrast indexCubeMap: major axis -> face, remaining pair -> (u, v) sources.
    c = jnp.where(use_z, z, jnp.where(use_y, y, x))
    uu = jnp.where(use_x, z, x)
    vv = jnp.where(use_y, z, y)
    face = jnp.where(use_z, 4, jnp.where(use_y, 2, 0)) + (c < 0).astype(jnp.int32)

    m = 0.5 / jnp.abs(c)            # single exact f32 divide per pixel (index bit-stability)
    m0 = jnp.where(c < 0, -m, m)
    m1 = jnp.where(face == 2, m, -m)
    u = uu * m0 + 0.5               # in [0, 1]
    v = vv * m1 + 0.5

    # Bilinear footprint on a res x res face.
    uf = u * res - 0.5
    vf = v * res - 0.5
    iu0f = jnp.floor(uf)
    iv0f = jnp.floor(vf)
    fu = uf - iu0f
    fv = vf - iv0f
    iu0 = iu0f.astype(jnp.int32)
    iv0 = iv0f.astype(jnp.int32)
    # TODO(synk): boundary_mode='cube' wraps bilinear taps across cube-face seams in
    # nvdiffrast; here taps are clamped to the selected face (differs only on the
    # 1-texel border ring of each face).
    iu1 = jnp.clip(iu0 + 1, 0, res - 1)
    iv1 = jnp.clip(iv0 + 1, 0, res - 1)
    iu0 = jnp.clip(iu0, 0, res - 1)
    iv0 = jnp.clip(iv0, 0, res - 1)

    fbase = face * (res * res)
    r0 = fbase + iv0 * res
    r1 = fbase + iv1 * res
    idx_ref[0, :, :] = r0 + iu0
    idx_ref[1, :, :] = r0 + iu1
    idx_ref[2, :, :] = r1 + iu0
    idx_ref[3, :, :] = r1 + iu1

    fuv_ref[0, :, :] = fu
    fuv_ref[1, :, :] = fv


def bilinear_blend_kernel(tex_ref, fuv_ref, o_ref):
    """tex_ref: [12, R, 128] gathered corner texels, index = corner*3 + channel.
    fuv_ref: [2, R, 128] (fu, fv).  o_ref: [3, R, 128] RGB (f32)."""
    fu = fuv_ref[0, :, :]
    fv = fuv_ref[1, :, :]
    w0 = (1.0 - fu) * (1.0 - fv)
    w1 = fu * (1.0 - fv)
    w2 = (1.0 - fu) * fv
    w3 = fu * fv
    for ch in range(3):
        t0 = tex_ref[0 * 3 + ch, :, :].astype(jnp.float32)
        t1 = tex_ref[1 * 3 + ch, :, :].astype(jnp.float32)
        t2 = tex_ref[2 * 3 + ch, :, :].astype(jnp.float32)
        t3 = tex_ref[3 * 3 + ch, :, :].astype(jnp.float32)
        o_ref[ch, :, :] = w0 * t0 + w1 * t1 + w2 * t2 + w3 * t3


def envlight_forward(l, base, *, max_tile_rows=256, texel_dtype=None):
    """EnvLight.forward: l [..., 3] directions, base [6, res, res, 3] cube map.

    Pixels are packed densely as [*, rows, 128].  Each grid step processes up to
    max_tile_rows*128 pixels (256 rows == 32768 pixels, ~a few MB of VMEM double-
    buffered).  texel_dtype=jnp.bfloat16 halves scattered gather bytes (v6e/v7x);
    the blend always accumulates in f32.
    """
    assert l.shape[-1] == 3
    prefix = l.shape[:-1]
    res = base.shape[1]

    dirs = l.reshape(-1, 3).astype(jnp.float32)
    npix = dirs.shape[0]

    rows_needed = -(-npix // 128)
    tile_rows = min(max_tile_rows, _round_up(max(rows_needed, 1), 8))
    n_tiles = -(-rows_needed // tile_rows)
    n_tiles = max(n_tiles, 1)
    n_rows = n_tiles * tile_rows
    npad = n_rows * 128

    if npad != npix:
        dirs = jnp.pad(dirs, ((0, npad - npix), (0, 0)), mode="edge")
    dirs_t = dirs.T.reshape(3, n_rows, 128)          # pixels dense on (sublane, lane)

    grid = (n_tiles,)
    cparams = pltpu.CompilerParams(
        dimension_semantics=("parallel",),
        vmem_limit_bytes=64 * 1024 * 1024,
    )

    idx4, fuv = pl.pallas_call(
        functools.partial(cube_addr_kernel, res=res),
        out_shape=(jax.ShapeDtypeStruct((4, n_rows, 128), jnp.int32),
                   jax.ShapeDtypeStruct((2, n_rows, 128), jnp.float32)),
        grid_spec=pltpu.PrefetchScalarGridSpec(
            num_scalar_prefetch=0,
            grid=grid,
            in_specs=[pl.BlockSpec((3, tile_rows, 128), lambda i: (0, i, 0))],
            out_specs=[pl.BlockSpec((4, tile_rows, 128), lambda i: (0, i, 0)),
                       pl.BlockSpec((2, tile_rows, 128), lambda i: (0, i, 0))],
        ),
        compiler_params=cparams,
    )(dirs_t)

    # TODO(synk): the data-dependent cube-map texel fetch (the core of dr.texture) has no
    # efficient vectorized Pallas/TPU equivalent; contiguous-row XLA gather instead
    # (one 12-byte row per corner rather than 3 scattered 4-byte reads).
    base_flat = base.reshape(6 * res * res, 3)
    if texel_dtype is not None:
        base_flat = base_flat.astype(texel_dtype)
    texels = jnp.take(base_flat, idx4.reshape(-1), axis=0)           # [4*npad, 3]
    texels = texels.reshape(4, n_rows, 128, 3)
    texels = jnp.transpose(texels, (0, 3, 1, 2)).reshape(12, n_rows, 128)

    light_t = pl.pallas_call(
        bilinear_blend_kernel,
        out_shape=jax.ShapeDtypeStruct((3, n_rows, 128), jnp.float32),
        grid_spec=pltpu.PrefetchScalarGridSpec(
            num_scalar_prefetch=0,
            grid=grid,
            in_specs=[pl.BlockSpec((12, tile_rows, 128), lambda i: (0, i, 0)),
                      pl.BlockSpec((2, tile_rows, 128), lambda i: (0, i, 0))],
            out_specs=pl.BlockSpec((3, tile_rows, 128), lambda i: (0, i, 0)),
        ),
        compiler_params=cparams,
    )(texels, fuv)

    light = jnp.transpose(light_t, (1, 2, 0)).reshape(npad, 3)[:npix]
    return light.reshape(prefix + (3,))


def reference_forward(l, base):
    """Plain-JAX reference mirroring EnvLight.forward (same cube conventions/clamp)."""
    to_opengl = jnp.array([[1.0, 0.0, 0.0], [0.0, 0.0, 1.0], [0.0, -1.0, 0.0]],
                          dtype=jnp.float32)
    res = base.shape[1]
    prefix = l.shape[:-1]

    d = l.reshape(-1, 3) @ to_opengl.T
    x, y, z = d[:, 0], d[:, 1], d[:, 2]
    ax, ay, az = jnp.abs(x), jnp.abs(y), jnp.abs(z)
    use_z = az > jnp.maximum(ax, ay)
    use_y = (~use_z) & (ay > ax)
    use_x = ~(use_z | use_y)

    c = jnp.where(use_z, z, jnp.where(use_y, y, x))
    uu = jnp.where(use_x, z, x)
    vv = jnp.where(use_y, z, y)
    face = jnp.where(use_z, 4, jnp.where(use_y, 2, 0)) + (c < 0).astype(jnp.int32)

    m = 0.5 / jnp.abs(c)
    m0 = jnp.where(c < 0, -m, m)
    m1 = jnp.where(face == 2, m, -m)
    u = uu * m0 + 0.5
    v = vv * m1 + 0.5

    uf = u * res - 0.5
    vf = v * res - 0.5
    iu0f = jnp.floor(uf)
    iv0f = jnp.floor(vf)
    fu = uf - iu0f
    fv = vf - iv0f
    iu0 = iu0f.astype(jnp.int32)
    iv0 = iv0f.astype(jnp.int32)
    iu1 = jnp.clip(iu0 + 1, 0, res - 1)
    iv1 = jnp.clip(iv0 + 1, 0, res - 1)
    iu0 = jnp.clip(iu0, 0, res - 1)
    iv0 = jnp.clip(iv0, 0, res - 1)

    t00 = base[face, iv0, iu0]
    t10 = base[face, iv0, iu1]
    t01 = base[face, iv1, iu0]
    t11 = base[face, iv1, iu1]
    out = (t00 * ((1 - fu) * (1 - fv))[:, None] + t10 * (fu * (1 - fv))[:, None]
           + t01 * ((1 - fu) * fv)[:, None] + t11 * (fu * fv)[:, None])
    return out.reshape(prefix + (3,))


if __name__ == "__main__":
    key = jax.random.PRNGKey(0)
    k_dirs, k_base = jax.random.split(key)

    res = 64  # small test resolution (module default is 1024)
    # The module's parameter; deterministic random values stand in for a trained envmap so
    # the bilinear cube sampling is actually exercised (the module init is 0.5*ones).
    base = jax.random.uniform(k_base, (6, res, res, 3), dtype=jnp.float32)
    # Direction map [B, H, W, 3] (the len(prefix) == 3 path of the PyTorch forward).
    l = jax.random.normal(k_dirs, (2, 16, 16, 3), dtype=jnp.float32)

    out = jax.jit(envlight_forward)(l, base)
    out = jax.block_until_ready(out)

    ref = reference_forward(l, base)
    assert out.shape == ref.shape == (2, 16, 16, 3)
    err = float(jnp.max(jnp.abs(out - ref)))
    assert err < 1e-4, f"mismatch vs reference: {err}"
    print("KERNEL_OK")
</pallas_src>

<mosaic_0001>
module attributes {stable_mosaic.version = 11 : i64} {
  func.func private @main(%arg0: i32) attributes {dimension_semantics = [#tpu.dimension_semantics<core_parallel>], iteration_bounds = array<i64: 2>, tpu.core_type = #tpu.core_type<sc_scalar_subcore>, window_params = []} {
    return
  }
}

module attributes {stable_mosaic.version = 11 : i64} {
  func.func private @main(%arg0: i32) attributes {dimension_semantics = [#tpu.dimension_semantics<core_parallel>], iteration_bounds = array<i64: 2>, tpu.core_type = #tpu.core_type<sc_scalar_subcore>, window_params = []} {
    return
  }
}

module attributes {stable_mosaic.version = 11 : i64} {
  func.func @cube_addr_kernel(%arg0: i32, %arg1: memref<3x8x128xf32, #tpu.memory_space<vmem>>, %arg2: memref<4x8x128xi32, #tpu.memory_space<vmem>>, %arg3: memref<2x8x128xf32, #tpu.memory_space<vmem>>) attributes {dimension_semantics = [#tpu.dimension_semantics<parallel>], iteration_bounds = array<i64: 1>, scalar_prefetch = 0 : i64, scratch_operands = 0 : i64, tpu.core_type = #tpu.core_type<tc>, window_params = [{transform_indices = @transform_0, window_bounds = array<i64: 3, 8, 128>}, {transform_indices = @transform_1, window_bounds = array<i64: 4, 8, 128>}, {transform_indices = @transform_2, window_bounds = array<i64: 2, 8, 128>}]} {
    %c0 = arith.constant 0 : index
    %c0_0 = arith.constant 0 : index
    %c0_1 = arith.constant 0 : index
    %0 = vector.load %arg1[%c0, %c0_0, %c0_1] : memref<3x8x128xf32, #tpu.memory_space<vmem>>, vector<1x8x128xf32>
    %1 = vector.shape_cast %0 : vector<1x8x128xf32> to vector<8x128xf32>
    %c2 = arith.constant 2 : index
    %c0_2 = arith.constant 0 : index
    %c0_3 = arith.constant 0 : index
    %2 = vector.load %arg1[%c2, %c0_2, %c0_3] : memref<3x8x128xf32, #tpu.memory_space<vmem>>, vector<1x8x128xf32>
    %3 = vector.shape_cast %2 : vector<1x8x128xf32> to vector<8x128xf32>
    %c1 = arith.constant 1 : index
    %c0_4 = arith.constant 0 : index
    %c0_5 = arith.constant 0 : index
    %4 = vector.load %arg1[%c1, %c0_4, %c0_5] : memref<3x8x128xf32, #tpu.memory_space<vmem>>, vector<1x8x128xf32>
    %5 = vector.shape_cast %4 : vector<1x8x128xf32> to vector<8x128xf32>
    %cst = arith.constant 0.000000e+00 : f32
    %6 = vector.broadcast %cst : f32 to vector<8x128xf32>
    %7 = arith.subf %6, %5 : vector<8x128xf32>
    %8 = math.absf %1 : vector<8x128xf32>
    %9 = math.absf %3 : vector<8x128xf32>
    %10 = math.absf %7 : vector<8x128xf32>
    %11 = arith.maximumf %8, %9 : vector<8x128xf32>
    %12 = arith.cmpf ogt, %10, %11 : vector<8x128xf32>
    %cst_6 = arith.constant dense<true> : vector<8x128xi1>
    %13 = arith.xori %12, %cst_6 : vector<8x128xi1>
    %14 = arith.cmpf ogt, %9, %8 : vector<8x128xf32>
    %15 = arith.andi %13, %14 : vector<8x128xi1>
    %16 = arith.ori %12, %15 : vector<8x128xi1>
    %cst_7 = arith.constant dense<true> : vector<8x128xi1>
    %17 = arith.xori %16, %cst_7 : vector<8x128xi1>
    %18 = arith.select %15, %3, %1 : vector<8x128xi1>, vector<8x128xf32>
    %19 = arith.select %12, %7, %18 : vector<8x128xi1>, vector<8x128xf32>
    %20 = arith.select %17, %7, %1 : vector<8x128xi1>, vector<8x128xf32>
    %21 = arith.select %15, %7, %3 : vector<8x128xi1>, vector<8x128xf32>
    %c2_i32 = arith.constant 2 : i32
    %c0_i32 = arith.constant 0 : i32
    %22 = vector.broadcast %c2_i32 : i32 to vector<8x128xi32>
    %23 = vector.broadcast %c0_i32 : i32 to vector<8x128xi32>
    %24 = arith.select %15, %22, %23 : vector<8x128xi1>, vector<8x128xi32>
    %c4_i32 = arith.constant 4 : i32
    %25 = vector.broadcast %c4_i32 : i32 to vector<8x128xi32>
    %26 = arith.select %12, %25, %24 : vector<8x128xi1>, vector<8x128xi32>
    %cst_8 = arith.constant 0.000000e+00 : f32
    %27 = vector.broadcast %cst_8 : f32 to vector<8x128xf32>
    %28 = arith.cmpf olt, %19, %27 : vector<8x128xf32>
    %29 = arith.extui %28 : vector<8x128xi1> to vector<8x128xi32>
    %30 = arith.addi %26, %29 : vector<8x128xi32>
    %31 = math.absf %19 : vector<8x128xf32>
    %cst_9 = arith.constant 5.000000e-01 : f32
    %32 = vector.broadcast %cst_9 : f32 to vector<8x128xf32>
    %33 = arith.divf %32, %31 : vector<8x128xf32>
    %cst_10 = arith.constant 0.000000e+00 : f32
    %34 = vector.broadcast %cst_10 : f32 to vector<8x128xf32>
    %35 = arith.cmpf olt, %19, %34 : vector<8x128xf32>
    %cst_11 = arith.constant 0.000000e+00 : f32
    %36 = vector.broadcast %cst_11 : f32 to vector<8x128xf32>
    %37 = arith.subf %36, %33 : vector<8x128xf32>
    %38 = arith.select %35, %37, %33 : vector<8x128xi1>, vector<8x128xf32>
    %c2_i32_12 = arith.constant 2 : i32
    %39 = vector.broadcast %c2_i32_12 : i32 to vector<8x128xi32>
    %40 = arith.cmpi eq, %30, %39 : vector<8x128xi32>
    %cst_13 = arith.constant 0.000000e+00 : f32
    %41 = vector.broadcast %cst_13 : f32 to vector<8x128xf32>
    %42 = arith.subf %41, %33 : vector<8x128xf32>
    %43 = arith.select %40, %33, %42 : vector<8x128xi1>, vector<8x128xf32>
    %44 = arith.mulf %20, %38 : vector<8x128xf32>
    %cst_14 = arith.constant 5.000000e-01 : f32
    %45 = vector.broadcast %cst_14 : f32 to vector<8x128xf32>
    %46 = arith.addf %44, %45 : vector<8x128xf32>
    %47 = arith.mulf %21, %43 : vector<8x128xf32>
    %cst_15 = arith.constant 5.000000e-01 : f32
    %48 = vector.broadcast %cst_15 : f32 to vector<8x128xf32>
    %49 = arith.addf %47, %48 : vector<8x128xf32>
    %cst_16 = arith.constant 6.400000e+01 : f32
    %50 = vector.broadcast %cst_16 : f32 to vector<8x128xf32>
    %51 = arith.mulf %46, %50 : vector<8x128xf32>
    %cst_17 = arith.constant 5.000000e-01 : f32
    %52 = vector.broadcast %cst_17 : f32 to vector<8x128xf32>
    %53 = arith.subf %51, %52 : vector<8x128xf32>
    %cst_18 = arith.constant 6.400000e+01 : f32
    %54 = vector.broadcast %cst_18 : f32 to vector<8x128xf32>
    %55 = arith.mulf %49, %54 : vector<8x128xf32>
    %cst_19 = arith.constant 5.000000e-01 : f32
    %56 = vector.broadcast %cst_19 : f32 to vector<8x128xf32>
    %57 = arith.subf %55, %56 : vector<8x128xf32>
    %58 = math.floor %53 : vector<8x128xf32>
    %59 = math.floor %57 : vector<8x128xf32>
    %60 = arith.subf %53, %58 : vector<8x128xf32>
    %61 = arith.subf %57, %59 : vector<8x128xf32>
    %62 = arith.fptosi %58 : vector<8x128xf32> to vector<8x128xi32>
    %63 = arith.fptosi %59 : vector<8x128xf32> to vector<8x128xi32>
    %c1_i32 = arith.constant 1 : i32
    %64 = vector.broadcast %c1_i32 : i32 to vector<8x128xi32>
    %65 = arith.addi %62, %64 : vector<8x128xi32>
    %c0_i32_20 = arith.constant 0 : i32
    %c63_i32 = arith.constant 63 : i32
    %66 = vector.broadcast %c0_i32_20 : i32 to vector<8x128xi32>
    %67 = arith.maxsi %66, %65 : vector<8x128xi32>
    %68 = vector.broadcast %c63_i32 : i32 to vector<8x128xi32>
    %69 = arith.minsi %68, %67 : vector<8x128xi32>
    %c1_i32_21 = arith.constant 1 : i32
    %70 = vector.broadcast %c1_i32_21 : i32 to vector<8x128xi32>
    %71 = arith.addi %63, %70 : vector<8x128xi32>
    %c0_i32_22 = arith.constant 0 : i32
    %c63_i32_23 = arith.constant 63 : i32
    %72 = vector.broadcast %c0_i32_22 : i32 to vector<8x128xi32>
    %73 = arith.maxsi %72, %71 : vector<8x128xi32>
    %74 = vector.broadcast %c63_i32_23 : i32 to vector<8x128xi32>
    %75 = arith.minsi %74, %73 : vector<8x128xi32>
    %c0_i32_24 = arith.constant 0 : i32
    %c63_i32_25 = arith.constant 63 : i32
    %76 = vector.broadcast %c0_i32_24 : i32 to vector<8x128xi32>
    %77 = arith.maxsi %76, %62 : vector<8x128xi32>
    %78 = vector.broadcast %c63_i32_25 : i32 to vector<8x128xi32>
    %79 = arith.minsi %78, %77 : vector<8x128xi32>
    %c0_i32_26 = arith.constant 0 : i32
    %c63_i32_27 = arith.constant 63 : i32
    %80 = vector.broadcast %c0_i32_26 : i32 to vector<8x128xi32>
    %81 = arith.maxsi %80, %63 : vector<8x128xi32>
    %82 = vector.broadcast %c63_i32_27 : i32 to vector<8x128xi32>
    %83 = arith.minsi %82, %81 : vector<8x128xi32>
    %c4096_i32 = arith.constant 4096 : i32
    %84 = vector.broadcast %c4096_i32 : i32 to vector<8x128xi32>
    %85 = arith.muli %30, %84 : vector<8x128xi32>
    %c64_i32 = arith.constant 64 : i32
    %86 = vector.broadcast %c64_i32 : i32 to vector<8x128xi32>
    %87 = arith.muli %83, %86 : vector<8x128xi32>
    %88 = arith.addi %85, %87 : vector<8x128xi32>
    %c64_i32_28 = arith.constant 64 : i32
    %89 = vector.broadcast %c64_i32_28 : i32 to vector<8x128xi32>
    %90 = arith.muli %75, %89 : vector<8x128xi32>
    %91 = arith.addi %85, %90 : vector<8x128xi32>
    %92 = arith.addi %88, %79 : vector<8x128xi32>
    %c0_29 = arith.constant 0 : index
    %c0_30 = arith.constant 0 : index
    %c0_31 = arith.constant 0 : index
    %93 = vector.load %arg2[%c0_29, %c0_30, %c0_31] : memref<4x8x128xi32, #tpu.memory_space<vmem>>, vector<1x8x128xi32>
    %94 = vector.shape_cast %93 : vector<1x8x128xi32> to vector<8x128xi32>
    %95 = vector.shape_cast %92 : vector<8x128xi32> to vector<1x8x128xi32>
    tpu.vector_store %arg2[%c0_29, %c0_30, %c0_31], %95 {strides = array<i32>} : memref<4x8x128xi32, #tpu.memory_space<vmem>>, vector<1x8x128xi32>,
    %96 = arith.addi %88, %69 : vector<8x128xi32>
    %c1_32 = arith.constant 1 : index
    %c0_33 = arith.constant 0 : index
    %c0_34 = arith.constant 0 : index
    %97 = vector.load %arg2[%c1_32, %c0_33, %c0_34] : memref<4x8x128xi32, #tpu.memory_space<vmem>>, vector<1x8x128xi32>
    %98 = vector.shape_cast %97 : vector<1x8x128xi32> to vector<8x128xi32>
    %99 = vector.shape_cast %96 : vector<8x128xi32> to vector<1x8x128xi32>
    tpu.vector_store %arg2[%c1_32, %c0_33, %c0_34], %99 {strides = array<i32>} : memref<4x8x128xi32, #tpu.memory_space<vmem>>, vector<1x8x128xi32>,
    %100 = arith.addi %91, %79 : vector<8x128xi32>
    %c2_35 = arith.constant 2 : index
    %c0_36 = arith.constant 0 : index
    %c0_37 = arith.constant 0 : index
    %101 = vector.load %arg2[%c2_35, %c0_36, %c0_37] : memref<4x8x128xi32, #tpu.memory_space<vmem>>, vector<1x8x128xi32>
    %102 = vector.shape_cast %101 : vector<1x8x128xi32> to vector<8x128xi32>
    %103 = vector.shape_cast %100 : vector<8x128xi32> to vector<1x8x128xi32>
    tpu.vector_store %arg2[%c2_35, %c0_36, %c0_37], %103 {strides = array<i32>} : memref<4x8x128xi32, #tpu.memory_space<vmem>>, vector<1x8x128xi32>,
    %104 = arith.addi %91, %69 : vector<8x128xi32>
    %c3 = arith.constant 3 : index
    %c0_38 = arith.constant 0 : index
    %c0_39 = arith.constant 0 : index
    %105 = vector.load %arg2[%c3, %c0_38, %c0_39] : memref<4x8x128xi32, #tpu.memory_space<vmem>>, vector<1x8x128xi32>
    %106 = vector.shape_cast %105 : vector<1x8x128xi32> to vector<8x128xi32>
    %107 = vector.shape_cast %104 : vector<8x128xi32> to vector<1x8x128xi32>
    tpu.vector_store %arg2[%c3, %c0_38, %c0_39], %107 {strides = array<i32>} : memref<4x8x128xi32, #tpu.memory_space<vmem>>, vector<1x8x128xi32>,
    %c0_40 = arith.constant 0 : index
    %c0_41 = arith.constant 0 : index
    %c0_42 = arith.constant 0 : index
    %108 = vector.load %arg3[%c0_40, %c0_41, %c0_42] : memref<2x8x128xf32, #tpu.memory_space<vmem>>, vector<1x8x128xf32>
    %109 = vector.shape_cast %108 : vector<1x8x128xf32> to vector<8x128xf32>
    %110 = vector.shape_cast %60 : vector<8x128xf32> to vector<1x8x128xf32>
    tpu.vector_store %arg3[%c0_40, %c0_41, %c0_42], %110 {strides = array<i32>} : memref<2x8x128xf32, #tpu.memory_space<vmem>>, vector<1x8x128xf32>,
    %c1_43 = arith.constant 1 : index
    %c0_44 = arith.constant 0 : index
    %c0_45 = arith.constant 0 : index
    %111 = vector.load %arg3[%c1_43, %c0_44, %c0_45] : memref<2x8x128xf32, #tpu.memory_space<vmem>>, vector<1x8x128xf32>
    %112 = vector.shape_cast %111 : vector<1x8x128xf32> to vector<8x128xf32>
    %113 = vector.shape_cast %61 : vector<8x128xf32> to vector<1x8x128xf32>
    tpu.vector_store %arg3[%c1_43, %c0_44, %c0_45], %113 {strides = array<i32>} : memref<2x8x128xf32, #tpu.memory_space<vmem>>, vector<1x8x128xf32>,
    return
  }
  func.func @transform_0(%arg0: i32) -> (i32, i32, i32) {
    %c0_i32 = arith.constant 0 : i32
    %c0_i32_0 = arith.constant 0 : i32
    %c0_i32_1 = arith.constant 0 : i32
    return %c0_i32, %arg0, %c0_i32_0 : i32, i32, i32
  }
  func.func @transform_1(%arg0: i32) -> (i32, i32, i32) {
    %c0_i32 = arith.constant 0 : i32
    %c0_i32_0 = arith.constant 0 : i32
    %c0_i32_1 = arith.constant 0 : i32
    return %c0_i32, %arg0, %c0_i32_0 : i32, i32, i32
  }
  func.func @transform_2(%arg0: i32) -> (i32, i32, i32) {
    %c0_i32 = arith.constant 0 : i32
    %c0_i32_0 = arith.constant 0 : i32
    %c0_i32_1 = arith.constant 0 : i32
    return %c0_i32, %arg0, %c0_i32_0 : i32, i32, i32
  }
}

module attributes {stable_mosaic.version = 11 : i64} {
  func.func @bilinear_blend_kernel(%arg0: i32, %arg1: memref<12x8x128xf32, #tpu.memory_space<vmem>>, %arg2: memref<2x8x128xf32, #tpu.memory_space<vmem>>, %arg3: memref<3x8x128xf32, #tpu.memory_space<vmem>>) attributes {dimension_semantics = [#tpu.dimension_semantics<parallel>], iteration_bounds = array<i64: 1>, scalar_prefetch = 0 : i64, scratch_operands = 0 : i64, tpu.core_type = #tpu.core_type<tc>, window_params = [{transform_indices = @transform_0, window_bounds = array<i64: 12, 8, 128>}, {transform_indices = @transform_1, window_bounds = array<i64: 2, 8, 128>}, {transform_indices = @transform_2, window_bounds = array<i64: 3, 8, 128>}]} {
    %c0 = arith.constant 0 : index
    %c0_0 = arith.constant 0 : index
    %c0_1 = arith.constant 0 : index
    %0 = vector.load %arg2[%c0, %c0_0, %c0_1] : memref<2x8x128xf32, #tpu.memory_space<vmem>>, vector<1x8x128xf32>
    %1 = vector.shape_cast %0 : vector<1x8x128xf32> to vector<8x128xf32>
    %c1 = arith.constant 1 : index
    %c0_2 = arith.constant 0 : index
    %c0_3 = arith.constant 0 : index
    %2 = vector.load %arg2[%c1, %c0_2, %c0_3] : memref<2x8x128xf32, #tpu.memory_space<vmem>>, vector<1x8x128xf32>
    %3 = vector.shape_cast %2 : vector<1x8x128xf32> to vector<8x128xf32>
    %cst = arith.constant 1.000000e+00 : f32
    %4 = vector.broadcast %cst : f32 to vector<8x128xf32>
    %5 = arith.subf %4, %1 : vector<8x128xf32>
    %cst_4 = arith.constant 1.000000e+00 : f32
    %6 = vector.broadcast %cst_4 : f32 to vector<8x128xf32>
    %7 = arith.subf %6, %3 : vector<8x128xf32>
    %8 = arith.mulf %5, %7 : vector<8x128xf32>
    %cst_5 = arith.constant 1.000000e+00 : f32
    %9 = vector.broadcast %cst_5 : f32 to vector<8x128xf32>
    %10 = arith.subf %9, %3 : vector<8x128xf32>
    %11 = arith.mulf %1, %10 : vector<8x128xf32>
    %cst_6 = arith.constant 1.000000e+00 : f32
    %12 = vector.broadcast %cst_6 : f32 to vector<8x128xf32>
    %13 = arith.subf %12, %1 : vector<8x128xf32>
    %14 = arith.mulf %13, %3 : vector<8x128xf32>
    %15 = arith.mulf %1, %3 : vector<8x128xf32>
    %c0_7 = arith.constant 0 : index
    %c0_8 = arith.constant 0 : index
    %c0_9 = arith.constant 0 : index
    %16 = vector.load %arg1[%c0_7, %c0_8, %c0_9] : memref<12x8x128xf32, #tpu.memory_space<vmem>>, vector<1x8x128xf32>
    %17 = vector.shape_cast %16 : vector<1x8x128xf32> to vector<8x128xf32>
    %c3 = arith.constant 3 : index
    %c0_10 = arith.constant 0 : index
    %c0_11 = arith.constant 0 : index
    %18 = vector.load %arg1[%c3, %c0_10, %c0_11] : memref<12x8x128xf32, #tpu.memory_space<vmem>>, vector<1x8x128xf32>
    %19 = vector.shape_cast %18 : vector<1x8x128xf32> to vector<8x128xf32>
    %c6 = arith.constant 6 : index
    %c0_12 = arith.constant 0 : index
    %c0_13 = arith.constant 0 : index
    %20 = vector.load %arg1[%c6, %c0_12, %c0_13] : memref<12x8x128xf32, #tpu.memory_space<vmem>>, vector<1x8x128xf32>
    %21 = vector.shape_cast %20 : vector<1x8x128xf32> to vector<8x128xf32>
    %c9 = arith.constant 9 : index
    %c0_14 = arith.constant 0 : index
    %c0_15 = arith.constant 0 : index
    %22 = vector.load %arg1[%c9, %c0_14, %c0_15] : memref<12x8x128xf32, #tpu.memory_space<vmem>>, vector<1x8x128xf32>
    %23 = vector.shape_cast %22 : vector<1x8x128xf32> to vector<8x128xf32>
    %24 = arith.mulf %8, %17 : vector<8x128xf32>
    %25 = arith.mulf %11, %19 : vector<8x128xf32>
    %26 = arith.addf %24, %25 : vector<8x128xf32>
    %27 = arith.mulf %14, %21 : vector<8x128xf32>
    %28 = arith.addf %26, %27 : vector<8x128xf32>
    %29 = arith.mulf %15, %23 : vector<8x128xf32>
    %30 = arith.addf %28, %29 : vector<8x128xf32>
    %c0_16 = arith.constant 0 : index
    %c0_17 = arith.constant 0 : index
    %c0_18 = arith.constant 0 : index
    %31 = vector.load %arg3[%c0_16, %c0_17, %c0_18] : memref<3x8x128xf32, #tpu.memory_space<vmem>>, vector<1x8x128xf32>
    %32 = vector.shape_cast %31 : vector<1x8x128xf32> to vector<8x128xf32>
    %33 = vector.shape_cast %30 : vector<8x128xf32> to vector<1x8x128xf32>
    tpu.vector_store %arg3[%c0_16, %c0_17, %c0_18], %33 {strides = array<i32>} : memref<3x8x128xf32, #tpu.memory_space<vmem>>, vector<1x8x128xf32>,
    %c1_19 = arith.constant 1 : index
    %c0_20 = arith.constant 0 : index
    %c0_21 = arith.constant 0 : index
    %34 = vector.load %arg1[%c1_19, %c0_20, %c0_21] : memref<12x8x128xf32, #tpu.memory_space<vmem>>, vector<1x8x128xf32>
    %35 = vector.shape_cast %34 : vector<1x8x128xf32> to vector<8x128xf32>
    %c4 = arith.constant 4 : index
    %c0_22 = arith.constant 0 : index
    %c0_23 = arith.constant 0 : index
    %36 = vector.load %arg1[%c4, %c0_22, %c0_23] : memref<12x8x128xf32, #tpu.memory_space<vmem>>, vector<1x8x128xf32>
    %37 = vector.shape_cast %36 : vector<1x8x128xf32> to vector<8x128xf32>
    %c7 = arith.constant 7 : index
    %c0_24 = arith.constant 0 : index
    %c0_25 = arith.constant 0 : index
    %38 = vector.load %arg1[%c7, %c0_24, %c0_25] : memref<12x8x128xf32, #tpu.memory_space<vmem>>, vector<1x8x128xf32>
    %39 = vector.shape_cast %38 : vector<1x8x128xf32> to vector<8x128xf32>
    %c10 = arith.constant 10 : index
    %c0_26 = arith.constant 0 : index
    %c0_27 = arith.constant 0 : index
    %40 = vector.load %arg1[%c10, %c0_26, %c0_27] : memref<12x8x128xf32, #tpu.memory_space<vmem>>, vector<1x8x128xf32>
    %41 = vector.shape_cast %40 : vector<1x8x128xf32> to vector<8x128xf32>
    %42 = arith.mulf %8, %35 : vector<8x128xf32>
    %43 = arith.mulf %11, %37 : vector<8x128xf32>
    %44 = arith.addf %42, %43 : vector<8x128xf32>
    %45 = arith.mulf %14, %39 : vector<8x128xf32>
    %46 = arith.addf %44, %45 : vector<8x128xf32>
    %47 = arith.mulf %15, %41 : vector<8x128xf32>
    %48 = arith.addf %46, %47 : vector<8x128xf32>
    %c1_28 = arith.constant 1 : index
    %c0_29 = arith.constant 0 : index
    %c0_30 = arith.constant 0 : index
    %49 = vector.load %arg3[%c1_28, %c0_29, %c0_30] : memref<3x8x128xf32, #tpu.memory_space<vmem>>, vector<1x8x128xf32>
    %50 = vector.shape_cast %49 : vector<1x8x128xf32> to vector<8x128xf32>
    %51 = vector.shape_cast %48 : vector<8x128xf32> to vector<1x8x128xf32>
    tpu.vector_store %arg3[%c1_28, %c0_29, %c0_30], %51 {strides = array<i32>} : memref<3x8x128xf32, #tpu.memory_space<vmem>>, vector<1x8x128xf32>,
    %c2 = arith.constant 2 : index
    %c0_31 = arith.constant 0 : index
    %c0_32 = arith.constant 0 : index
    %52 = vector.load %arg1[%c2, %c0_31, %c0_32] : memref<12x8x128xf32, #tpu.memory_space<vmem>>, vector<1x8x128xf32>
    %53 = vector.shape_cast %52 : vector<1x8x128xf32> to vector<8x128xf32>
    %c5 = arith.constant 5 : index
    %c0_33 = arith.constant 0 : index
    %c0_34 = arith.constant 0 : index
    %54 = vector.load %arg1[%c5, %c0_33, %c0_34] : memref<12x8x128xf32, #tpu.memory_space<vmem>>, vector<1x8x128xf32>
    %55 = vector.shape_cast %54 : vector<1x8x128xf32> to vector<8x128xf32>
    %c8 = arith.constant 8 : index
    %c0_35 = arith.constant 0 : index
    %c0_36 = arith.constant 0 : index
    %56 = vector.load %arg1[%c8, %c0_35, %c0_36] : memref<12x8x128xf32, #tpu.memory_space<vmem>>, vector<1x8x128xf32>
    %57 = vector.shape_cast %56 : vector<1x8x128xf32> to vector<8x128xf32>
    %c11 = arith.constant 11 : index
    %c0_37 = arith.constant 0 : index
    %c0_38 = arith.constant 0 : index
    %58 = vector.load %arg1[%c11, %c0_37, %c0_38] : memref<12x8x128xf32, #tpu.memory_space<vmem>>, vector<1x8x128xf32>
    %59 = vector.shape_cast %58 : vector<1x8x128xf32> to vector<8x128xf32>
    %60 = arith.mulf %8, %53 : vector<8x128xf32>
    %61 = arith.mulf %11, %55 : vector<8x128xf32>
    %62 = arith.addf %60, %61 : vector<8x128xf32>
    %63 = arith.mulf %14, %57 : vector<8x128xf32>
    %64 = arith.addf %62, %63 : vector<8x128xf32>
    %65 = arith.mulf %15, %59 : vector<8x128xf32>
    %66 = arith.addf %64, %65 : vector<8x128xf32>
    %c2_39 = arith.constant 2 : index
    %c0_40 = arith.constant 0 : index
    %c0_41 = arith.constant 0 : index
    %67 = vector.load %arg3[%c2_39, %c0_40, %c0_41] : memref<3x8x128xf32, #tpu.memory_space<vmem>>, vector<1x8x128xf32>
    %68 = vector.shape_cast %67 : vector<1x8x128xf32> to vector<8x128xf32>
    %69 = vector.shape_cast %66 : vector<8x128xf32> to vector<1x8x128xf32>
    tpu.vector_store %arg3[%c2_39, %c0_40, %c0_41], %69 {strides = array<i32>} : memref<3x8x128xf32, #tpu.memory_space<vmem>>, vector<1x8x128xf32>,
    return
  }
  func.func @transform_0(%arg0: i32) -> (i32, i32, i32) {
    %c0_i32 = arith.constant 0 : i32
    %c0_i32_0 = arith.constant 0 : i32
    %c0_i32_1 = arith.constant 0 : i32
    return %c0_i32, %arg0, %c0_i32_0 : i32, i32, i32
  }
  func.func @transform_1(%arg0: i32) -> (i32, i32, i32) {
    %c0_i32 = arith.constant 0 : i32
    %c0_i32_0 = arith.constant 0 : i32
    %c0_i32_1 = arith.constant 0 : i32
    return %c0_i32, %arg0, %c0_i32_0 : i32, i32, i32
  }
  func.func @transform_2(%arg0: i32) -> (i32, i32, i32) {
    %c0_i32 = arith.constant 0 : i32
    %c0_i32_0 = arith.constant 0 : i32
    %c0_i32_1 = arith.constant 0 : i32
    return %c0_i32, %arg0, %c0_i32_0 : i32, i32, i32
  }
}

</mosaic_0001>

<llo_original>
// kernel: envlight_forward.3
$region0: #{envlight_forward.3}
  #allocation0 [shape = 'u32[]', space=smem, size = 0x4, offset = 0x4, fixed_abs, tag = 'smem constant byte address 0x4 - core index']
  #allocation1 [shape = 'u32[144,128]{1,0:T(1,128)}', space=vmem, size = 0x12000, scoped, tag = 'internal scratch']
  %s0 = inlined_call_operand.hbm [shape: f32[12,8,128], index: 0, kind: input, shape index: {}]
  %s1 = inlined_call_operand.hbm [shape: f32[2,8,128], index: 1, kind: input, shape index: {}]
  %s2 = inlined_call_operand.hbm [shape: f32[3,8,128], index: 2, kind: output, shape index: {}]
  %s3 = sld [smem:[#allocation0]]
  $region26: #{envlight_forward.3} parent=0
    _
  %s5 = ssub.s32 1, %s3
  %s6 = scalar_select 0, %s5, %s3
  $region1: #{envlight_forward.3} parent=0
    #allocation2 [shape = 'u8[49152]{0}', space=vmem, size = 0xc000, scoped, tag = 'input window, operand 0, single buffered']
    #allocation3 [shape = 's32[1]{0}', space=sflag, size = 0x4, scoped, tag = 'scoped memory for envlight_forward.3']
    #allocation4 [shape = 's32[1]{0}', space=sflag, size = 0x4, scoped, tag = 'scoped memory for envlight_forward.3']
    #allocation5 [shape = 'u8[8192]{0}', space=vmem, size = 0x2000, scoped, tag = 'input window, operand 1, single buffered']
    #allocation6 [shape = 's32[1]{0}', space=sflag, size = 0x4, scoped, tag = 'scoped memory for envlight_forward.3']
    #allocation7 [shape = 'u8[12288]{0}', space=vmem, size = 0x3000, scoped, tag = 'output window, operand 0, single buffered']
    %7 = vsyncpa [#allocation3], 0
    %8 = vsyncpa [#allocation6], 0
    %9 = vsyncpa [#allocation4], 0
    // Predicated region
    $region2: #{envlight_forward.3} parent=1 // pred_check
      _
    $region3: #{envlight_forward.3} parent=1 // pred_check_branch
      %11 = sbr.rel (0) target = $region5
    $region4: #{envlight_forward.3} parent=1 // pred_region
      %s13 = ssub.s32 1536, 1536
      %14 = vsyncadd [#allocation3], %s13
      %s15 = sshll.u32 [#allocation2], 4
      %s16 = int_to_ptr.vmem [resolvable:$true] %s15
      %21 = dma.hbm_to_vmem [thread:$0]  %s0, 1536, %s16, [#allocation3], 128, 128, 8
    $region5: #{envlight_forward.3} parent=1 // pred_fallthru
      _
    // Predicated region
    $region6: #{envlight_forward.3} parent=1 // pred_check
      _
    $region7: #{envlight_forward.3} parent=1 // pred_check_branch
      %23 = sbr.rel (0) target = $region9
    $region8: #{envlight_forward.3} parent=1 // pred_region
      %s25 = ssub.s32 256, 256
      %26 = vsyncadd [#allocation6], %s25
      %s27 = sshll.u32 [#allocation5], 4
      %s28 = int_to_ptr.vmem [resolvable:$true] %s27
      %33 = dma.hbm_to_vmem [thread:$0]  %s1, 256, %s28, [#allocation6], 128, 128, 8
    $region9: #{envlight_forward.3} parent=1 // pred_fallthru
      _
    // Predicated region
    $region10: #{envlight_forward.3} parent=1 // pred_check
      _
    $region11: #{envlight_forward.3} parent=1 // pred_check_branch
      %35 = sbr.rel (0) target = $region13
    $region12: #{envlight_forward.3} parent=1 // pred_region
      %36 = dma.done [#allocation3], 1536
    $region13: #{envlight_forward.3} parent=1 // pred_fallthru
      _
    // Predicated region
    $region14: #{envlight_forward.3} parent=1 // pred_check
      _
    $region15: #{envlight_forward.3} parent=1 // pred_check_branch
      %38 = sbr.rel (0) target = $region17
    $region16: #{envlight_forward.3} parent=1 // pred_region
      %39 = dma.done [#allocation6], 256
    $region17: #{envlight_forward.3} parent=1 // pred_fallthru
      _
    %v40 = vld [vmem:[#allocation5] sm:$0xff]
    %s41 = scalar_lea.vmem [#allocation5], 8
    %v42 = vld [vmem:[%s41] sm:$0xff]
    %v43 = vsub.f32 1.0, %v40
    %v44 = vsub.f32 1.0, %v42
    %v45 = vmul.f32 %v43, %v44
    %v46 = vmul.f32 %v40, %v44
    %v47 = vmul.f32 %v43, %v42
    %v48 = vmul.f32 %v40, %v42
    %v49 = vld [vmem:[#allocation2] sm:$0xff]
    %s50 = scalar_lea.vmem [#allocation2], 24
    %v51 = vld [vmem:[%s50] sm:$0xff]
    %s52 = scalar_lea.vmem [#allocation2], 48
    %v53 = vld [vmem:[%s52] sm:$0xff]
    %s54 = scalar_lea.vmem [#allocation2], 72
    %v55 = vld [vmem:[%s54] sm:$0xff]
    %v56 = vmul.f32 %v45, %v49
    %v57 = vmul.f32 %v46, %v51
    %v58 = vadd.f32 %v56, %v57
    %v59 = vmul.f32 %v47, %v53
    %v60 = vadd.f32 %v58, %v59
    %v61 = vmul.f32 %v48, %v55
    %v62 = vadd.f32 %v60, %v61
    %63 = vst [vmem:[#allocation7] sm:$0xff] %v62
    %s64 = scalar_lea.vmem [#allocation2], 8
    %v65 = vld [vmem:[%s64] sm:$0xff]
    %s66 = scalar_lea.vmem [#allocation2], 32
    %v67 = vld [vmem:[%s66] sm:$0xff]
    %s68 = scalar_lea.vmem [#allocation2], 56
    %v69 = vld [vmem:[%s68] sm:$0xff]
    %s70 = scalar_lea.vmem [#allocation2], 80
    %v71 = vld [vmem:[%s70] sm:$0xff]
    %v72 = vmul.f32 %v45, %v65
    %v73 = vmul.f32 %v46, %v67
    %v74 = vadd.f32 %v72, %v73
    %v75 = vmul.f32 %v47, %v69
    %v76 = vadd.f32 %v74, %v75
    %v77 = vmul.f32 %v48, %v71
    %v78 = vadd.f32 %v76, %v77
    %s79 = scalar_lea.vmem [#allocation7], 8
    %80 = vst [vmem:[%s79] sm:$0xff] %v78
    %s81 = scalar_lea.vmem [#allocation2], 16
    %v82 = vld [vmem:[%s81] sm:$0xff]
    %s83 = scalar_lea.vmem [#allocation2], 40
    %v84 = vld [vmem:[%s83] sm:$0xff]
    %s85 = scalar_lea.vmem [#allocation2], 64
    %v86 = vld [vmem:[%s85] sm:$0xff]
    %s87 = scalar_lea.vmem [#allocation2], 88
    %v88 = vld [vmem:[%s87] sm:$0xff]
    %v89 = vmul.f32 %v45, %v82
    %v90 = vmul.f32 %v46, %v84
    %v91 = vadd.f32 %v89, %v90
    %v92 = vmul.f32 %v47, %v86
    %v93 = vadd.f32 %v91, %v92
    %v94 = vmul.f32 %v48, %v88
    %v95 = vadd.f32 %v93, %v94
    %s96 = scalar_lea.vmem [#allocation7], 16
    %97 = vst [vmem:[%s96] sm:$0xff] %v95
    // Predicated region
    $region18: #{envlight_forward.3} parent=1 // pred_check
      _
    $region19: #{envlight_forward.3} parent=1 // pred_check_branch
      %99 = sbr.rel (0) target = $region21
    $region20: #{envlight_forward.3} parent=1 // pred_region
      %s101 = ssub.s32 384, 384
      %102 = vsyncadd [#allocation4], %s101
      %s103 = sshll.u32 [#allocation7], 4
      %s104 = int_to_ptr.vmem [resolvable:$true] %s103
      %109 = dma.vmem_to_hbm [thread:$0]  %s104, 384, %s2, [#allocation4], 128, 128, 8
    $region21: #{envlight_forward.3} parent=1 // pred_fallthru
      _
    // Predicated region
    $region22: #{envlight_forward.3} parent=1 // pred_check
      _
    $region23: #{envlight_forward.3} parent=1 // pred_check_branch
      %111 = sbr.rel (0) target = $region25
    $region24: #{envlight_forward.3} parent=1 // pred_region
      %112 = dma.done [#allocation4], 384
    $region25: #{envlight_forward.3} parent=1 // pred_fallthru
      _
    %113 = vsyncpa [#allocation3], 1
    %114 = vsyncpa [#allocation6], 1
    %115 = vsyncpa [#allocation4], 1

// kernel: envlight_forward.2
$region0: #{envlight_forward.2}
  #allocation0 [shape = 'u32[]', space=smem, size = 0x4, offset = 0x4, fixed_abs, tag = 'smem constant byte address 0x4 - core index']
  #allocation1 [shape = 'u32[144,128]{1,0:T(1,128)}', space=vmem, size = 0x12000, scoped, tag = 'internal scratch']
  %s0 = inlined_call_operand.hbm [shape: f32[3,8,128], index: 0, kind: input, shape index: {}]
  %s1 = inlined_call_operand.hbm [shape: s32[4,8,128], index: 1, kind: output, shape index: {0}]
  %s2 = inlined_call_operand.hbm [shape: f32[2,8,128], index: 2, kind: output, shape index: {1}]
  %3 = xla_tuple %s1, %s2
  %s4 = sld [smem:[#allocation0]]
  $region26: #{envlight_forward.2} parent=0
    _
  %s6 = ssub.s32 1, %s4
  %s7 = scalar_select 0, %s6, %s4
  $region1: #{envlight_forward.2} parent=0
    #allocation2 [shape = 'u8[12288]{0}', space=vmem, size = 0x3000, scoped, tag = 'input window, operand 0, single buffered']
    #allocation3 [shape = 's32[1]{0}', space=sflag, size = 0x4, scoped, tag = 'scoped memory for envlight_forward.2']
    #allocation4 [shape = 's32[1]{0}', space=sflag, size = 0x4, scoped, tag = 'scoped memory for envlight_forward.2']
    #allocation5 [shape = 'u8[16384]{0}', space=vmem, size = 0x4000, scoped, tag = 'output window, operand 0, single buffered']
    #allocation6 [shape = 'u8[8192]{0}', space=vmem, size = 0x2000, scoped, tag = 'output window, operand 1, single buffered']
    #allocation7 [shape = 's32[1]{0}', space=sflag, size = 0x4, scoped, tag = 'scoped memory for envlight_forward.2']
    %8 = vsyncpa [#allocation3], 0
    %9 = vsyncpa [#allocation4], 0
    %10 = vsyncpa [#allocation7], 0
    // Predicated region
    $region2: #{envlight_forward.2} parent=1 // pred_check
      _
    $region3: #{envlight_forward.2} parent=1 // pred_check_branch
      %12 = sbr.rel (0) target = $region5
    $region4: #{envlight_forward.2} parent=1 // pred_region
      %s14 = ssub.s32 384, 384
      %15 = vsyncadd [#allocation3], %s14
      %s16 = sshll.u32 [#allocation2], 4
      %s17 = int_to_ptr.vmem [resolvable:$true] %s16
      %22 = dma.hbm_to_vmem [thread:$0]  %s0, 384, %s17, [#allocation3], 128, 128, 8
    $region5: #{envlight_forward.2} parent=1 // pred_fallthru
      _
    // Predicated region
    $region6: #{envlight_forward.2} parent=1 // pred_check
      _
    $region7: #{envlight_forward.2} parent=1 // pred_check_branch
      %24 = sbr.rel (0) target = $region9
    $region8: #{envlight_forward.2} parent=1 // pred_region
      %25 = dma.done [#allocation3], 384
    $region9: #{envlight_forward.2} parent=1 // pred_fallthru
      _
    %v26 = vld [vmem:[#allocation2] sm:$0xff]
    %s27 = scalar_lea.vmem [#allocation2], 16
    %v28 = vld [vmem:[%s27] sm:$0xff]
    %s29 = scalar_lea.vmem [#allocation2], 8
    %v30 = vld [vmem:[%s29] sm:$0xff]
    %v31 = vsub.f32 0.0, %v30
    %v32 = vand.u32 2147483647, %v26
    %v33 = vand.u32 2147483647, %v28
    %v34 = vand.u32 2147483647, %v31
    %v35 = vmax.f32 %v32, %v33
    %vm36 = vcmp.gt.f32.partialorder %v34, %v35
    %vm37 = vmxor %vm36, 1
    %vm38 = vcmp.gt.f32.partialorder %v33, %v32
    %vm39 = vmand %vm37, %vm38
    %vm40 = vmor %vm36, %vm39
    %vm41 = vmxor %vm40, 1
    %v42 = vsel %vm39, %v28, %v26
    %v43 = vsel %vm36, %v31, %v42
    %v44 = vsel %vm41, %v31, %v26
    %v45 = vsel %vm39, %v31, %v28
    %v46 = vsel %vm39, 2, 0
    %v47 = vsel %vm36, 4, %v46
    %vm48 = vcmp.lt.f32.partialorder %v43, 0.0
    %v49 = vsel %vm48, 1, 0
    %v50 = vadd.s32 %v47, %v49
    %v51 = vand.u32 2147483647, %v43
    %v52 = vrcp.pop %v51
    %v53 = vmul.f32 0.5, %v52
    %v54 = vsub.f32 0.0, %v53
    %v55 = vsel %vm48, %v54, %v53
    %vm56 = vcmp.eq.s32.totalorder %v50, 2
    %v57 = vsel %vm56, %v53, %v54
    %v58 = vmul.f32 %v44, %v55
    %v59 = vadd.f32 %v58, 0.5
    %v60 = vmul.f32 %v45, %v57
    %v61 = vadd.f32 %v60, 0.5
    %v62 = vmul.f32 %v59, 64.0
    %v63 = vsub.f32 %v62, 0.5
    %v64 = vmul.f32 %v61, 64.0
    %v65 = vsub.f32 %v64, 0.5
    %v66 = vfloor.f32 %v63
    %v67 = vfloor.f32 %v65
    %v68 = vsub.f32 %v63, %v66
    %v69 = vsub.f32 %v65, %v67
    %v70 = vcvt.f32.s32.to.zero.pseudo %v66
    %v71 = vcvt.f32.s32.to.zero.pseudo %v67
    %v72 = vadd.s32 %v70, 1
    %vm73 = vcmp.gt.s32.totalorder %v72, 0
    %v74 = vsel %vm73, %v72, 0
    %vm75 = vcmp.lt.s32.totalorder %v74, 63
    %v76 = vsel %vm75, %v74, 63
    %v77 = vadd.s32 %v71, 1
    %vm78 = vcmp.gt.s32.totalorder %v77, 0
    %v79 = vsel %vm78, %v77, 0
    %vm80 = vcmp.lt.s32.totalorder %v79, 63
    %v81 = vsel %vm80, %v79, 63
    %vm82 = vcmp.gt.s32.totalorder %v70, 0
    %v83 = vsel %vm82, %v70, 0
    %vm84 = vcmp.lt.s32.totalorder %v83, 63
    %v85 = vsel %vm84, %v83, 63
    %vm86 = vcmp.gt.s32.totalorder %v71, 0
    %v87 = vsel %vm86, %v71, 0
    %vm88 = vcmp.lt.s32.totalorder %v87, 63
    %v89 = vsel %vm88, %v87, 63
    %v90 = vmul.u32 %v50, 4096
    %v91 = vmul.u32 %v89, 64
    %v92 = vadd.s32 %v90, %v91
    %v93 = vmul.u32 %v81, 64
    %v94 = vadd.s32 %v90, %v93
    %v95 = vadd.s32 %v92, %v85
    %96 = vst [vmem:[#allocation5] sm:$0xff] %v95
    %v97 = vadd.s32 %v92, %v76
    %s98 = scalar_lea.vmem [#allocation5], 8
    %99 = vst [vmem:[%s98] sm:$0xff] %v97
    %v100 = vadd.s32 %v94, %v85
    %s101 = scalar_lea.vmem [#allocation5], 16
    %102 = vst [vmem:[%s101] sm:$0xff] %v100
    %v103 = vadd.s32 %v94, %v76
    %s104 = scalar_lea.vmem [#allocation5], 24
    %105 = vst [vmem:[%s104] sm:$0xff] %v103
    %106 = vst [vmem:[#allocation6] sm:$0xff] %v68
    %s107 = scalar_lea.vmem [#allocation6], 8
    %108 = vst [vmem:[%s107] sm:$0xff] %v69
    // Predicated region
    $region10: #{envlight_forward.2} parent=1 // pred_check
      _
    $region11: #{envlight_forward.2} parent=1 // pred_check_branch
      %110 = sbr.rel (0) target = $region13
    $region12: #{envlight_forward.2} parent=1 // pred_region
      %s112 = ssub.s32 512, 512
      %113 = vsyncadd [#allocation4], %s112
      %s114 = sshll.u32 [#allocation5], 4
      %s115 = int_to_ptr.vmem [resolvable:$true] %s114
      %120 = dma.vmem_to_hbm [thread:$0]  %s115, 512, %s1, [#allocation4], 128, 128, 8
    $region13: #{envlight_forward.2} parent=1 // pred_fallthru
      _
    // Predicated region
    $region14: #{envlight_forward.2} parent=1 // pred_check
      _
    $region15: #{envlight_forward.2} parent=1 // pred_check_branch
      %122 = sbr.rel (0) target = $region17
    $region16: #{envlight_forward.2} parent=1 // pred_region
      %s124 = ssub.s32 256, 256
      %125 = vsyncadd [#allocation7], %s124
      %s126 = sshll.u32 [#allocation6], 4
      %s127 = int_to_ptr.vmem [resolvable:$true] %s126
      %132 = dma.vmem_to_hbm [thread:$0]  %s127, 256, %s2, [#allocation7], 128, 128, 8
    $region17: #{envlight_forward.2} parent=1 // pred_fallthru
      _
    // Predicated region
    $region18: #{envlight_forward.2} parent=1 // pred_check
      _
    $region19: #{envlight_forward.2} parent=1 // pred_check_branch
      %134 = sbr.rel (0) target = $region21
    $region20: #{envlight_forward.2} parent=1 // pred_region
      %135 = dma.done [#allocation4], 512
    $region21: #{envlight_forward.2} parent=1 // pred_fallthru
      _
    // Predicated region
    $region22: #{envlight_forward.2} parent=1 // pred_check
      _
    $region23: #{envlight_forward.2} parent=1 // pred_check_branch
      %137 = sbr.rel (0) target = $region25
    $region24: #{envlight_forward.2} parent=1 // pred_region
      %138 = dma.done [#allocation7], 256
    $region25: #{envlight_forward.2} parent=1 // pred_fallthru
      _
    %139 = vsyncpa [#allocation3], 1
    %140 = vsyncpa [#allocation4], 1
    %141 = vsyncpa [#allocation7], 1

</llo_original>
